<compile_context>
chip_gen: v7x
topology: tpu7x:2x2x1
jax: 0.10.0
libtpu: 0.0.40
codegen_flags: <defaults>
</compile_context>

<pallas_src>
import functools

import jax
import jax.numpy as jnp
from jax import lax
from jax.experimental import pallas as pl
from jax.experimental.pallas import tpu as pltpu

_EPS = 1e-12
_MiB = 1024 * 1024


def _round_up(x, m):
    return ((x + m - 1) // m) * m


def _cdiv(a, b):
    return (a + b - 1) // b


def _detect_vmem_bytes():
    """Physical VMEM of the local chip; conservative (v7x-sized) fallback."""
    try:
        info = pltpu.get_tpu_info()
        for attr in ("vmem_capacity_bytes", "vmem_bytes", "vmem_size_bytes"):
            v = getattr(info, attr, None)
            if v:
                return int(v)
    except Exception:
        pass
    return 64 * _MiB


_VMEM_BYTES = _detect_vmem_bytes()
# Explicit scoped-VMEM limit (v5e default is only 16 MiB); leave 25% headroom.
_VMEM_LIMIT_BYTES = (3 * _VMEM_BYTES) // 4
# v7x (64 MiB VMEM, ~3.2 TB/s HBM): bigger tiles amortize per-step overhead.
_TARGET_TILE_BYTES = 4 * _MiB if _VMEM_BYTES <= 64 * _MiB else 2 * _MiB
# in + out double-buffered (~4 live tiles) + f32 compute temporaries -> /5.
_SINGLE_PASS_MAX_TILE_BYTES = _VMEM_LIMIT_BYTES // 5

_CP_KW = dict(vmem_limit_bytes=int(_VMEM_LIMIT_BYTES))


def _sublane(dtype):
    # Rows per packed sublane group: 8 for f32, 16 for bf16, 32 for int8/fp8.
    return max(8, 32 // jnp.dtype(dtype).itemsize)


def _pick_block_rows(n, f, dtype, target_tile_bytes):
    sub = _sublane(dtype)
    itemsize = jnp.dtype(dtype).itemsize
    budget = max(sub, (target_tile_bytes // max(f * itemsize, 1) // sub) * sub)
    # Keep >= 4 row tiles when n permits (2 TC sharding + pipeline overlap).
    cap = max(sub, _round_up(_cdiv(n, 4), sub))
    return int(min(budget, cap))


# ---------------- single-pass: one row tile holds the full feature dim --------

def _l2n_rowtile_kernel(x_ref, o_ref):
    x = x_ref[...].astype(jnp.float32)
    ss = jnp.sum(x * x, axis=1, keepdims=True)             # (rows, 1)  XLU reduce
    inv = lax.rsqrt(jnp.maximum(ss, _EPS * _EPS))           # == 1/max(sqrt(ss), eps)
    o_ref[...] = (x * inv).astype(o_ref.dtype)


def _l2_normalize_single_pass(x2d):
    n, f = x2d.shape
    block_rows = _pick_block_rows(n, f, x2d.dtype, _TARGET_TILE_BYTES)
    grid = (_cdiv(n, block_rows),)   # ragged last row tile handled by Pallas
    return pl.pallas_call(
        _l2n_rowtile_kernel,
        out_shape=jax.ShapeDtypeStruct((n, f), x2d.dtype),
        grid=grid,
        in_specs=[pl.BlockSpec((block_rows, f), lambda i: (i, 0))],
        out_specs=pl.BlockSpec((block_rows, f), lambda i: (i, 0)),
        compiler_params=pltpu.CompilerParams(
            dimension_semantics=("parallel",), **_CP_KW),
    )(x2d)


# --------------- two-pass: feature dim too large for one row tile -------------

def _sumsq_kernel(x_ref, inv_ref, acc_ref, *, f, block_f, needs_mask):
    j = pl.program_id(1)

    @pl.when(j == 0)
    def _():
        acc_ref[...] = jnp.zeros_like(acc_ref)

    x = x_ref[...].astype(jnp.float32)
    if needs_mask:
        # Mask the ragged feature tail so OOB garbage columns don't pollute
        # valid rows' sums (row-direction OOB is per-row independent -> safe).
        col = j * block_f + lax.broadcasted_iota(jnp.int32, x.shape, 1)
        x = jnp.where(col < f, x, 0.0)
    acc_ref[...] += jnp.sum(x * x, axis=1, keepdims=True)

    @pl.when(j == pl.num_programs(1) - 1)
    def _():
        # Emit the inverse norm directly; pass 2 is a single broadcast multiply.
        inv_ref[...] = lax.rsqrt(jnp.maximum(acc_ref[...], _EPS * _EPS))


def _scale_kernel(x_ref, inv_ref, o_ref):
    o_ref[...] = (x_ref[...].astype(jnp.float32) * inv_ref[...]).astype(o_ref.dtype)


def _l2_normalize_two_pass(x2d, *, block_rows=None, block_f=None):
    n, f = x2d.shape
    itemsize = jnp.dtype(x2d.dtype).itemsize
    sub = _sublane(x2d.dtype)

    if block_rows is None:
        # Wider row tiles -> far fewer sub-128-lane (rows, 1) stores in pass 1,
        # still capped so >= 4 row tiles exist when n permits.
        block_rows = int(min(max(sub, _round_up(_cdiv(n, 4), sub)), 16 * sub))
    if block_f is None:
        # Size block_f so feature tiles are near-equal and the tail tile wastes
        # as little DMA as possible (no host-side padding anywhere).
        target_f = max(128, (_TARGET_TILE_BYTES // (block_rows * itemsize) // 128) * 128)
        n_f_tiles = max(1, _cdiv(f, target_f))
        block_f = int(min(_round_up(_cdiv(f, n_f_tiles), 128), _round_up(f, 128)))

    needs_mask = (f % block_f) != 0
    grid = (_cdiv(n, block_rows), _cdiv(f, block_f))
    sumsq = functools.partial(_sumsq_kernel, f=f, block_f=block_f,
                              needs_mask=needs_mask)

    # Pass 1: per-row inverse L2 norm, reduced over feature tiles.
    inv = pl.pallas_call(
        sumsq,
        out_shape=jax.ShapeDtypeStruct((n, 1), jnp.float32),
        grid=grid,
        in_specs=[pl.BlockSpec((block_rows, block_f), lambda i, j: (i, j))],
        out_specs=pl.BlockSpec((block_rows, 1), lambda i, j: (i, 0)),
        scratch_shapes=[pltpu.VMEM((block_rows, 1), jnp.float32)],
        compiler_params=pltpu.CompilerParams(
            dimension_semantics=("parallel", "arbitrary"), **_CP_KW),
    )(x2d)

    # Pass 2: rescale each feature tile by the per-row inverse norm.
    return pl.pallas_call(
        _scale_kernel,
        out_shape=jax.ShapeDtypeStruct((n, f), x2d.dtype),
        grid=grid,
        in_specs=[pl.BlockSpec((block_rows, block_f), lambda i, j: (i, j)),
                  pl.BlockSpec((block_rows, 1), lambda i, j: (i, 0))],
        out_specs=pl.BlockSpec((block_rows, block_f), lambda i, j: (i, j)),
        compiler_params=pltpu.CompilerParams(
            dimension_semantics=("parallel", "parallel"), **_CP_KW),
    )(x2d, inv)


# ------------------------------- public wrapper --------------------------------

@functools.partial(jax.jit, static_argnames=("scale",))
def pattern_norm(x, scale=1.0):
    """JAX/Pallas equivalent of the PyTorch pattern_norm module's forward."""
    del scale  # the PyTorch module stores `scale` but never uses it in forward
    sizes = x.shape
    if len(sizes) > 2:
        n = sizes[0]
        f = 1
        for s in sizes[1:]:
            f *= s
        flat = x.reshape(n, f)
        # Single pass whenever a minimal (one sublane group) row tile fits the
        # per-generation VMEM budget; otherwise fall back to two passes.
        min_tile_bytes = _sublane(x.dtype) * f * jnp.dtype(x.dtype).itemsize
        if min_tile_bytes > _SINGLE_PASS_MAX_TILE_BYTES:
            flat = _l2_normalize_two_pass(flat)
        else:
            flat = _l2_normalize_single_pass(flat)
        return flat.reshape(sizes)
    return x


if __name__ == "__main__":
    key = jax.random.PRNGKey(0)
    # NCHW input, matching the PyTorch convention.
    x = jax.random.normal(key, (2, 4, 16, 16), dtype=jnp.float32)

    out = jax.block_until_ready(pattern_norm(x))

    # Reference (same math as torch.nn.functional.normalize, p=2, dim=1, eps=1e-12).
    flat = x.reshape(x.shape[0], -1)
    denom = jnp.maximum(jnp.sqrt(jnp.sum(flat * flat, axis=1, keepdims=True)), _EPS)
    ref = (flat / denom).reshape(x.shape)
    assert out.shape == x.shape and out.dtype == x.dtype
    assert jnp.allclose(out, ref, atol=1e-5, rtol=1e-5)

    # ndim <= 2 passthrough path.
    x2 = jax.random.normal(jax.random.PRNGKey(1), (4, 8), dtype=jnp.float32)
    out2 = jax.block_until_ready(pattern_norm(x2))
    assert jnp.allclose(out2, x2)

    # Exercise the two-pass (large-feature) fallback with unaligned n and f so
    # the ragged row tiles and the in-kernel feature-tail mask are both hit
    # (n=3 not a multiple of 8, f=300 not a multiple of 128).
    x3 = jax.random.normal(jax.random.PRNGKey(2), (3, 300), dtype=jnp.float32)
    out3 = jax.block_until_ready(
        _l2_normalize_two_pass(x3, block_rows=8, block_f=128))
    denom3 = jnp.maximum(jnp.sqrt(jnp.sum(x3 * x3, axis=1, keepdims=True)), _EPS)
    assert jnp.allclose(out3, x3 / denom3, atol=1e-5, rtol=1e-5)

    # bf16 path (16-row sublane packing); compare against an f32 reference.
    x4 = jax.random.normal(jax.random.PRNGKey(3), (2, 4, 16, 16)).astype(jnp.bfloat16)
    out4 = jax.block_until_ready(pattern_norm(x4))
    f4 = x4.astype(jnp.float32).reshape(2, -1)
    ref4 = (f4 / jnp.maximum(jnp.sqrt(jnp.sum(f4 * f4, axis=1, keepdims=True)),
                             _EPS)).reshape(x4.shape)
    assert out4.shape == x4.shape and out4.dtype == jnp.bfloat16
    assert jnp.allclose(out4.astype(jnp.float32), ref4, atol=2e-2, rtol=2e-2)

    print("KERNEL_OK")
</pallas_src>

<mosaic_0001>
module attributes {stable_mosaic.version = 11 : i64} {
  func.func @_l2n_rowtile_kernel(%arg0: i32, %arg1: memref<8x1024xf32, #tpu.memory_space<vmem>>, %arg2: memref<8x1024xf32, #tpu.memory_space<vmem>>) attributes {dimension_semantics = [#tpu.dimension_semantics<parallel>], iteration_bounds = array<i64: 1>, scalar_prefetch = 0 : i64, scratch_operands = 0 : i64, tpu.core_type = #tpu.core_type<tc>, window_params = [{transform_indices = @transform_0, window_bounds = array<i64: 8, 1024>}, {transform_indices = @transform_1, window_bounds = array<i64: 8, 1024>}]} {
    %c0 = arith.constant 0 : index
    %c0_0 = arith.constant 0 : index
    %0 = vector.load %arg1[%c0, %c0_0] : memref<8x1024xf32, #tpu.memory_space<vmem>>, vector<8x1024xf32>
    %1 = arith.mulf %0, %0 : vector<8x1024xf32>
    %cst = arith.constant dense<0.000000e+00> : vector<8xf32>
    %2 = vector.multi_reduction <add>, %1, %cst [1] : vector<8x1024xf32> to vector<8xf32>
    %3 = vector.shape_cast %2 : vector<8xf32> to vector<8x1xf32>
    %cst_1 = arith.constant 1.000000e-24 : f32
    %4 = vector.broadcast %cst_1 : f32 to vector<8x1xf32>
    %5 = arith.maximumf %3, %4 : vector<8x1xf32>
    %6 = math.rsqrt %5 : vector<8x1xf32>
    %7 = vector.broadcast %6 : vector<8x1xf32> to vector<8x1024xf32>
    %8 = arith.mulf %0, %7 : vector<8x1024xf32>
    %c0_2 = arith.constant 0 : index
    %c0_3 = arith.constant 0 : index
    %9 = vector.load %arg2[%c0_2, %c0_3] : memref<8x1024xf32, #tpu.memory_space<vmem>>, vector<8x1024xf32>
    tpu.vector_store %arg2[%c0_2, %c0_3], %8 {strides = array<i32>} : memref<8x1024xf32, #tpu.memory_space<vmem>>, vector<8x1024xf32>,
    return
  }
  func.func @transform_0(%arg0: i32) -> (i32, i32) {
    %c0_i32 = arith.constant 0 : i32
    %c0_i32_0 = arith.constant 0 : i32
    return %arg0, %c0_i32 : i32, i32
  }
  func.func @transform_1(%arg0: i32) -> (i32, i32) {
    %c0_i32 = arith.constant 0 : i32
    %c0_i32_0 = arith.constant 0 : i32
    return %arg0, %c0_i32 : i32, i32
  }
}

</mosaic_0001>

<llo_original>
// kernel: pattern_norm.1
$region0: #{pattern_norm.1}
  #allocation0 [shape = 'u32[]', space=smem, size = 0x4, offset = 0x4, fixed_abs, tag = 'smem constant byte address 0x4 - core index']
  #allocation1 [shape = 'u32[144,128]{1,0:T(1,128)}', space=vmem, size = 0x12000, scoped, tag = 'internal scratch']
  %s0 = inlined_call_operand.vmem [shape: f32[2,1024], index: 0, kind: input, shape index: {}]
  %s1 = inlined_call_operand.vmem [shape: f32[2,1024], index: 1, kind: output, shape index: {}]
  %s2 = sld [smem:[#allocation0]]
  $region33: #{pattern_norm.1} parent=0
    _
  %s4 = ssub.s32 1, %s2
  %s5 = scalar_select 0, %s4, %s2
  $region1: #{pattern_norm.1} parent=0
    #allocation2 [shape = 'u8[32768]{0}', space=vmem, size = 0x8000, scoped, tag = 'output window, operand 0, single buffered']
    // Predicated region
    $region2: #{pattern_norm.1} parent=1 // pred_check
      _
    $region3: #{pattern_norm.1} parent=1 // pred_check_branch
      %7 = sbr.rel (0) target = $region5
    $region4: #{pattern_norm.1} parent=1 // pred_region
      _
    $region5: #{pattern_norm.1} parent=1 // pred_fallthru
      _
    %v8 = vld [vmem:[%s0] sm:$0xff]
    %v9 = vld [vmem:[%s0 + $0x8] sm:$0xff]
    %v10 = vld [vmem:[%s0 + $0x10] sm:$0xff]
    %v11 = vld [vmem:[%s0 + $0x18] sm:$0xff]
    %v12 = vld [vmem:[%s0 + $0x20] sm:$0xff]
    %v13 = vld [vmem:[%s0 + $0x28] sm:$0xff]
    %v14 = vld [vmem:[%s0 + $0x30] sm:$0xff]
    %v15 = vld [vmem:[%s0 + $0x38] sm:$0xff]
    %v16 = vmul.f32 %v8, %v8
    %v17 = vmul.f32 %v9, %v9
    %v18 = vmul.f32 %v10, %v10
    %v19 = vmul.f32 %v11, %v11
    %v20 = vmul.f32 %v12, %v12
    %v21 = vmul.f32 %v13, %v13
    %v22 = vmul.f32 %v14, %v14
    %v23 = vmul.f32 %v15, %v15
    %v32 = vcombine.low %v16, %v18
    %v33 = vcombine.high %v16, %v18
    %v34 = vcombine.low %v20, %v22
    %v35 = vcombine.high %v20, %v22
    %v37 = vunpack.c.l.s4 1983009808
    %v38 = vunpack.c.0.s8 %v37
    %v39 = vlaneseq
    %v40 = vshrl.u32 %v39, 7
    %v41 = vsub.s32 %v38, %v40
    %v42 = vrot.slane %v32, %v41
    %v44 = vunpack.c.l.s4 1983009808
    %v45 = vunpack.c.0.s8 %v44
    %v46 = vlaneseq
    %v47 = vshrl.u32 %v46, 7
    %v48 = vsub.s32 %v45, %v47
    %v49 = vrot.slane %v33, %v48
    %v51 = vunpack.c.l.s4 1983009808
    %v52 = vunpack.c.0.s8 %v51
    %v53 = vlaneseq
    %v54 = vshrl.u32 %v53, 7
    %v55 = vsub.s32 %v52, %v54
    %v56 = vrot.slane %v34, %v55
    %v58 = vunpack.c.l.s4 1983009808
    %v59 = vunpack.c.0.s8 %v58
    %v60 = vlaneseq
    %v61 = vshrl.u32 %v60, 7
    %v62 = vsub.s32 %v59, %v61
    %v63 = vrot.slane %v35, %v62
    %v64 = vcombine.low %v42, %v56
    %v65 = vcombine.high %v42, %v56
    %v66 = vcombine.low %v49, %v63
    %v67 = vcombine.high %v49, %v63
    %v68 = vcombine.low %v17, %v19
    %v69 = vcombine.high %v17, %v19
    %v70 = vcombine.low %v21, %v23
    %v71 = vcombine.high %v21, %v23
    %v73 = vunpack.c.l.s4 1983009808
    %v74 = vunpack.c.0.s8 %v73
    %v75 = vlaneseq
    %v76 = vshrl.u32 %v75, 7
    %v77 = vsub.s32 %v74, %v76
    %v78 = vrot.slane %v68, %v77
    %v80 = vunpack.c.l.s4 1983009808
    %v81 = vunpack.c.0.s8 %v80
    %v82 = vlaneseq
    %v83 = vshrl.u32 %v82, 7
    %v84 = vsub.s32 %v81, %v83
    %v85 = vrot.slane %v69, %v84
    %v87 = vunpack.c.l.s4 1983009808
    %v88 = vunpack.c.0.s8 %v87
    %v89 = vlaneseq
    %v90 = vshrl.u32 %v89, 7
    %v91 = vsub.s32 %v88, %v90
    %v92 = vrot.slane %v70, %v91
    %v94 = vunpack.c.l.s4 1983009808
    %v95 = vunpack.c.0.s8 %v94
    %v96 = vlaneseq
    %v97 = vshrl.u32 %v96, 7
    %v98 = vsub.s32 %v95, %v97
    %v99 = vrot.slane %v71, %v98
    %v100 = vcombine.low %v78, %v92
    %v101 = vcombine.high %v78, %v92
    %v102 = vcombine.low %v85, %v99
    %v103 = vcombine.high %v85, %v99
    %v112 = vadd.f32 %v64, %v65
    %v113 = vadd.f32 %v112, %v66
    %v114 = vadd.f32 %v113, %v67
    %v115 = vadd.f32 %v114, %v100
    %v116 = vadd.f32 %v115, %v101
    %v117 = vadd.f32 %v116, %v102
    %v118 = vadd.f32 %v117, %v103
    %119 = vadd.xlane.f32.xlu0 %v118
    %v120 = vpop.xlane.xlu0 %119
    %v121 = vmax.f32 %v120, 1e-24
    %v122 = vrsqrt.pop %v121
    %v125 = vunpack.c.l.s4 269488144
    %v126 = vunpack.c.0.s8 %v125
    %v127 = vlaneseq
    %v128 = vshrl.u32 %v127, 7
    %v129 = vsub.s32 %v126, %v128
    %v130 = vrot.slane %v122, %v129
    %v132 = vunpack.c.l.s4 842150450
    %v133 = vunpack.c.0.s8 %v132
    %v134 = vlaneseq
    %v135 = vshrl.u32 %v134, 7
    %v136 = vsub.s32 %v133, %v135
    %v137 = vrot.slane %v122, %v136
    %v139 = vunpack.c.l.s4 1414812756
    %v140 = vunpack.c.0.s8 %v139
    %v141 = vlaneseq
    %v142 = vshrl.u32 %v141, 7
    %v143 = vsub.s32 %v140, %v142
    %v144 = vrot.slane %v122, %v143
    %v146 = vunpack.c.l.s4 1987475062
    %v147 = vunpack.c.0.s8 %v146
    %v148 = vlaneseq
    %v149 = vshrl.u32 %v148, 7
    %v150 = vsub.s32 %v147, %v149
    %v151 = vrot.slane %v122, %v150
    %v156 = vmul.f32 %v8, %v130
    %v157 = vmul.f32 %v9, %v130
    %v158 = vmul.f32 %v10, %v137
    %v159 = vmul.f32 %v11, %v137
    %v160 = vmul.f32 %v12, %v144
    %v161 = vmul.f32 %v13, %v144
    %v162 = vmul.f32 %v14, %v151
    %v163 = vmul.f32 %v15, %v151
    %164 = vst [vmem:[#allocation2] sm:$0xff] %v156
    %165 = vst [vmem:[#allocation2 + $0x8] sm:$0xff] %v157
    %166 = vst [vmem:[#allocation2 + $0x10] sm:$0xff] %v158
    %167 = vst [vmem:[#allocation2 + $0x18] sm:$0xff] %v159
    %168 = vst [vmem:[#allocation2 + $0x20] sm:$0xff] %v160
    %169 = vst [vmem:[#allocation2 + $0x28] sm:$0xff] %v161
    %170 = vst [vmem:[#allocation2 + $0x30] sm:$0xff] %v162
    %171 = vst [vmem:[#allocation2 + $0x38] sm:$0xff] %v163
    // Predicated region
    $region6: #{pattern_norm.1} parent=1 // pred_check
      _
    $region7: #{pattern_norm.1} parent=1 // pred_check_branch
      %173 = sbr.rel (0) target = $region9
    $region8: #{pattern_norm.1} parent=1 // pred_region
      // Predicated region
      $region10: #{pattern_norm.1} parent=8 // pred_check
        _
      $region11: #{pattern_norm.1} parent=8 // pred_check_branch
        %175 = sbr.rel (0) target = $region13
      $region12: #{pattern_norm.1} parent=8 // pred_region
        // Predicated region
        $region14: #{pattern_norm.1} parent=12 // pred_check
          _
        $region15: #{pattern_norm.1} parent=12 // pred_check_branch
          %177 = sbr.rel (0) target = $region17
        $region16: #{pattern_norm.1} parent=12 // pred_region
          loop: start=0, step=1, limit=1
          $region18: #{pattern_norm.1} parent=16 // loop_pre_header
            _
          $region19: #{pattern_norm.1} parent=16 // loop_header
            %s179 = sphi 0, %s183
            %p180 = scmp.ge.s32.totalorder %s179, 1
            %s184 = sphi [#allocation2], [#allocation2]
            %s185 = sphi %s1, %s1
          $region20: #{pattern_norm.1} parent=16 // loop_header_branch
            %182 = sbr.rel (%p180) target = $region24
          $region21: #{pattern_norm.1} parent=16 // loop_body
            %v186 = vld [vmem:[%s184] sm:$0xff]
            %187 = vst [vmem:[%s185] sm:$0xff] %v186
            %v188 = vld [vmem:[%s184 + $0x8] sm:$0xff]
            %189 = vst [vmem:[%s185 + $0x8] sm:$0xff] %v188
          $region22: #{pattern_norm.1} parent=16 // loop_footer
            %s183 = sadd.s32 1, %s179
          $region23: #{pattern_norm.1} parent=16 // loop_footer_branch
            %178 = sbr.rel target = $region19
          $region24: #{pattern_norm.1} parent=16 // loop_exit
            _
        $region17: #{pattern_norm.1} parent=12 // pred_fallthru
          _
        // Predicated region
        $region25: #{pattern_norm.1} parent=12 // pred_check
          _
        $region26: #{pattern_norm.1} parent=12 // pred_check_branch
          %191 = sbr.rel target = $region28
        $region27: #{pattern_norm.1} parent=12 // pred_region
          _
        $region28: #{pattern_norm.1} parent=12 // pred_fallthru
          _
      $region13: #{pattern_norm.1} parent=8 // pred_fallthru
        _
      %192 = vnop
    $region9: #{pattern_norm.1} parent=1 // pred_fallthru
      _
    // Predicated region
    $region29: #{pattern_norm.1} parent=1 // pred_check
      _
    $region30: #{pattern_norm.1} parent=1 // pred_check_branch
      %194 = sbr.rel (0) target = $region32
    $region31: #{pattern_norm.1} parent=1 // pred_region
      _
    $region32: #{pattern_norm.1} parent=1 // pred_fallthru
      _

</llo_original>
